<compile_context>
chip_gen: v5e
topology: v5e:2x2
jax: 0.10.0
libtpu: 0.0.40
codegen_flags: <defaults>
</compile_context>

<pallas_src>
import functools

import jax
import jax.numpy as jnp
from jax.experimental import pallas as pl
from jax.experimental.pallas import tpu as pltpu

_EPS = 1e-5


def _lane_col(x, j):
    """Column j of a 2-D tile as a (rows, 1) vector via masked cross-lane reduce
    (XLU work on a free slot; avoids width-1 lane-slice relayouts)."""
    col = jax.lax.broadcasted_iota(jnp.int32, x.shape, 1)
    return jnp.sum(jnp.where(col == j, x, 0.0), axis=1, keepdims=True)


def _mask_branch_kernel(x_ref, w_ref, bn_ref, att_ref, o_ref, *, C, Lm):
    Lout = 2 * Lm + 1

    # Packed weight slab: rows [0, 2C) = flattened Conv1d weight,
    #                     rows [2C, 4C) = stacked ConvTranspose1d taps [tap0.T ; tap1.T].
    w1 = w_ref[0:2 * C, :]                 # (2C, 2C)
    w2 = w_ref[2 * C:4 * C, :]             # (2C, 2C)

    # ---- conv1: Conv1d(C, 2C, k=2, stride=2) == one matmul over im2col'd input.
    #      Bias dropped: constant along length -> cancels in train-mode BN1.
    h = jnp.dot(w1, x_ref[...], preferred_element_type=jnp.float32)     # (2C, Lm)

    # ---- batchnorm1 (train-mode batch stats, N=1) + ReLU
    bn = bn_ref[...]                       # (2C, 4) = [g1 | be1 | g2(pad) | be2(pad)]
    g1 = _lane_col(bn, 0)
    be1 = _lane_col(bn, 1)
    m1 = jnp.mean(h, axis=1, keepdims=True)
    v1 = jnp.mean((h - m1) ** 2, axis=1, keepdims=True)
    h = jnp.maximum((h - m1) * jax.lax.rsqrt(v1 + _EPS) * g1 + be1, 0.0)

    # ---- conv2: ConvTranspose1d(2C, C, k=2, stride=2, output_padding=1),
    #      both taps in one matmul: rows [0,C) feed even output positions,
    #      rows [C,2C) feed odd ones.  Bias dropped (cancels in BN2).
    y2 = jnp.dot(w2, h, preferred_element_type=jnp.float32)             # (2C, Lm)
    y_even = y2[0:C, :]
    y_odd = y2[C:2 * C, :]

    # ---- batchnorm2: stats over all Lout positions (2*Lm interleaved positions
    #      plus the bias-free output_padding column == 0), computed directly on
    #      the pre-interleave tensors.
    bn_lo = bn[0:C, :]
    g2 = _lane_col(bn_lo, 2)
    be2 = _lane_col(bn_lo, 3)
    s = (jnp.sum(y_even, axis=1, keepdims=True)
         + jnp.sum(y_odd, axis=1, keepdims=True))
    m2 = s / Lout
    v2 = (jnp.sum((y_even - m2) ** 2, axis=1, keepdims=True)
          + jnp.sum((y_odd - m2) ** 2, axis=1, keepdims=True)
          + m2 * m2) / Lout
    sc2 = jax.lax.rsqrt(v2 + _EPS) * g2
    yn_even = (y_even - m2) * sc2 + be2
    yn_odd = (y_odd - m2) * sc2 + be2
    yn_pad = -m2 * sc2 + be2               # output_padding column (pre-BN value 0)

    # ---- interleave even/odd + pad column via a short compile-time select chain
    #      (Lm is tiny for this module); no scatter matrices, no extra MXU pushes.
    col = jax.lax.broadcasted_iota(jnp.int32, (C, Lout), 1)
    y = jnp.where(col == (Lout - 1), yn_pad, 0.0)
    for t in range(Lm):
        y = jnp.where(col == 2 * t, _lane_col(yn_even, t), y)
        y = jnp.where(col == 2 * t + 1, _lane_col(yn_odd, t), y)

    # ---- add precomputed attention projections + ReLU
    o_ref[...] = jnp.maximum(y + att_ref[...], 0.0)


def mask_branch_forward(param, params, h0, h1, *, in_channel, out_channel,
                        kernel_size):
    """Batched MaskBranch forward.

    param: (B, C, L)  -- B independent instances (PyTorch module uses B == 1)
    h0:    (B, hidden_dim1)
    h1:    (B, hidden_dim2)
    returns (B, out_channel, in_channel, kernel_size)
    """
    W1, b1, g1, be1, W2, b2, g2, be2, Wt, bt, Wl, bl = params
    C = in_channel * out_channel
    K = kernel_size
    B, Cin, L = param.shape
    assert Cin == C
    Lm = (L - 2) // 2 + 1                  # Conv1d(stride=2,k=2) output length
    Lout = 2 * Lm + 1                      # ConvTranspose1d output length
    assert Lout == K, f"ConvTranspose output length {Lout} != kernel_size {K}"

    f32 = jnp.float32
    # ---- plain-JAX glue: pure layout packing (a few KB total) ----
    # im2col: (B, C, L) -> (B, 2C, Lm), row index ci*2 + tap. Explicit slice
    # handles odd L (stride-2 conv drops the trailing element).
    x = param[:, :, :2 * Lm].astype(f32)
    x_col = x.reshape(B, C, Lm, 2).transpose(0, 1, 3, 2).reshape(B, 2 * C, Lm)

    # Single weight slab: [Conv1d weight flattened ; ConvTranspose taps stacked].
    W1f = W1.reshape(2 * C, 2 * C)                                   # col = ci*2 + tap
    W2cat = jnp.concatenate([W2[:, :, 0].T, W2[:, :, 1].T], axis=0)  # (2C, 2C)
    w_slab = jnp.concatenate([W1f, W2cat], axis=0).astype(f32)       # (4C, 2C)

    # BN affine params packed into one (2C, 4) slab (b1/b2 intentionally omitted:
    # constant-along-length biases cancel inside train-mode BN).
    zc = jnp.zeros((C,), f32)
    bn_pack = jnp.stack(
        [g1, be1, jnp.concatenate([g2, zc]), jnp.concatenate([be2, zc])],
        axis=1).astype(f32)                                          # (2C, 4)

    # Attention projections precomputed (tiny GEMV) -> one (B, C, K) tile.
    att = (h0 @ Wt.T + bt + h1 @ Wl.T + bl).reshape(B, C, K).astype(f32)

    kernel = functools.partial(_mask_branch_kernel, C=C, Lm=Lm)
    out = pl.pallas_call(
        kernel,
        grid=(B,),
        in_specs=[
            pl.BlockSpec((None, 2 * C, Lm), lambda b: (b, 0, 0)),
            pl.BlockSpec((4 * C, 2 * C), lambda b: (0, 0)),
            pl.BlockSpec((2 * C, 4), lambda b: (0, 0)),
            pl.BlockSpec((None, C, K), lambda b: (b, 0, 0)),
        ],
        out_specs=pl.BlockSpec((None, C, Lout), lambda b: (b, 0, 0)),
        out_shape=jax.ShapeDtypeStruct((B, C, Lout), f32),
        compiler_params=pltpu.CompilerParams(
            dimension_semantics=("parallel",)),
    )(x_col, w_slab, bn_pack, att)

    # PyTorch: hmid.view((out_channel, in_channel, kernel_size)) per instance.
    return out.reshape(B, out_channel, in_channel, kernel_size)


def reference(param, params, h0, h1, in_channel, out_channel, kernel_size):
    """Direct (non-fused) JAX reference, including the conv biases."""
    W1, b1, g1, be1, W2, b2, g2, be2, Wt, bt, Wl, bl = params
    eps = _EPS
    x = param[0]
    C = x.shape[0]
    Lm = (x.shape[1] - 2) // 2 + 1
    Lout = (Lm - 1) * 2 + 2 + 1
    xw = jnp.stack([x[:, 0::2][:, :Lm], x[:, 1::2][:, :Lm]], axis=1)  # (C,2,Lm)
    h = jnp.einsum('oik,ikt->ot', W1, xw) + b1[:, None]
    m = h.mean(axis=1, keepdims=True)
    v = ((h - m) ** 2).mean(axis=1, keepdims=True)
    h = jnp.maximum((h - m) / jnp.sqrt(v + eps) * g1[:, None] + be1[:, None], 0.0)
    y = jnp.zeros((C, Lout), jnp.float32) + b2[:, None]
    for k in range(2):
        contrib = jnp.einsum('ic,it->ct', W2[:, :, k], h)
        y = y.at[:, k:k + 2 * Lm:2].add(contrib)
    m = y.mean(axis=1, keepdims=True)
    v = ((y - m) ** 2).mean(axis=1, keepdims=True)
    y = (y - m) / jnp.sqrt(v + eps) * g2[:, None] + be2[:, None]
    at = (h0 @ Wt.T + bt).reshape(C, kernel_size)
    al = (h1 @ Wl.T + bl).reshape(C, kernel_size)
    y = jnp.maximum(y + at + al, 0.0)
    return y.reshape(out_channel, in_channel, kernel_size)


if __name__ == "__main__":
    # Module hyperparameters (param length L must satisfy Lout == kernel_size,
    # i.e. L == kernel_size - 1 with L even).
    in_channel, out_channel, kernel_size = 4, 4, 5
    hidden_dim1, hidden_dim2 = 8, 8
    B = 2                                  # independent instances, parallel grid
    C = in_channel * out_channel
    L = kernel_size - 1

    key = jax.random.PRNGKey(0)
    ks = jax.random.split(key, 16)
    rnd = lambda k, shape: jax.random.normal(k, shape, jnp.float32) * 0.1

    W1 = rnd(ks[0], (2 * C, C, 2))                       # Conv1d weight
    b1 = rnd(ks[1], (2 * C,))
    g1 = 1.0 + rnd(ks[2], (2 * C,))                      # BN1 gamma
    be1 = rnd(ks[3], (2 * C,))                           # BN1 beta
    W2 = rnd(ks[4], (2 * C, C, 2))                       # ConvTranspose1d weight
    b2 = rnd(ks[5], (C,))
    g2 = 1.0 + rnd(ks[6], (C,))
    be2 = rnd(ks[7], (C,))
    Wt = rnd(ks[8], (C * kernel_size, hidden_dim1))      # hiddentime2attention
    bt = rnd(ks[9], (C * kernel_size,))
    Wl = rnd(ks[10], (C * kernel_size, hidden_dim2))     # hiddenlayer2attention
    bl = rnd(ks[11], (C * kernel_size,))

    param = rnd(ks[12], (B, C, L))                       # B x (C, L) NCL inputs
    h0 = rnd(ks[13], (B, hidden_dim1))
    h1 = rnd(ks[14], (B, hidden_dim2))

    params = (W1, b1, g1, be1, W2, b2, g2, be2, Wt, bt, Wl, bl)

    out = mask_branch_forward(param, params, h0, h1,
                              in_channel=in_channel,
                              out_channel=out_channel,
                              kernel_size=kernel_size)
    out = jax.block_until_ready(out)
    assert out.shape == (B, out_channel, in_channel, kernel_size)

    ok = True
    for b in range(B):
        ref = reference(param[b:b + 1], params, h0[b:b + 1], h1[b:b + 1],
                        in_channel, out_channel, kernel_size)
        ok = ok and bool(jnp.allclose(out[b], ref, atol=1e-4, rtol=1e-4))
    assert ok, "mismatch vs reference"
    print("KERNEL_OK")
</pallas_src>

<mosaic_0001>
module attributes {stable_mosaic.version = 11 : i64} {
  func.func @_mask_branch_kernel(%arg0: i32, %arg1: memref<1x32x2xf32, #tpu.memory_space<vmem>>, %arg2: memref<64x32xf32, #tpu.memory_space<vmem>>, %arg3: memref<32x4xf32, #tpu.memory_space<vmem>>, %arg4: memref<1x16x5xf32, #tpu.memory_space<vmem>>, %arg5: memref<1x16x5xf32, #tpu.memory_space<vmem>>) attributes {dimension_semantics = [#tpu.dimension_semantics<parallel>], iteration_bounds = array<i64: 2>, scalar_prefetch = 0 : i64, scratch_operands = 0 : i64, tpu.core_type = #tpu.core_type<tc>, window_params = [{transform_indices = @transform_0, window_bounds = array<i64: 1, 32, 2>}, {pipeline_mode = #tpu.pipeline_mode<synchronous>, transform_indices = @transform_1, window_bounds = array<i64: 64, 32>}, {pipeline_mode = #tpu.pipeline_mode<synchronous>, transform_indices = @transform_2, window_bounds = array<i64: 32, 4>}, {transform_indices = @transform_3, window_bounds = array<i64: 1, 16, 5>}, {transform_indices = @transform_4, window_bounds = array<i64: 1, 16, 5>}]} {
    %c0 = arith.constant 0 : index
    %c0_0 = arith.constant 0 : index
    %0 = vector.load %arg2[%c0, %c0_0] : memref<64x32xf32, #tpu.memory_space<vmem>>, vector<32x32xf32>
    %c32 = arith.constant 32 : index
    %c0_1 = arith.constant 0 : index
    %1 = vector.load %arg2[%c32, %c0_1] : memref<64x32xf32, #tpu.memory_space<vmem>>, vector<32x32xf32>
    %c0_2 = arith.constant 0 : index
    %c0_3 = arith.constant 0 : index
    %c0_4 = arith.constant 0 : index
    %2 = vector.load %arg1[%c0_2, %c0_3, %c0_4] : memref<1x32x2xf32, #tpu.memory_space<vmem>>, vector<1x32x2xf32>
    %3 = vector.shape_cast %2 : vector<1x32x2xf32> to vector<32x2xf32>
    %cst = arith.constant dense<0.000000e+00> : vector<32x2xf32>
    %4 = tpu.matmul %0, %3, %cst {dimension_numbers = #tpu.dot_dimension_numbers<[1], [0], [0], [1], [0, 0, 1, 1], [], []>} : vector<32x32xf32>, vector<32x2xf32>, vector<32x2xf32> -> vector<32x2xf32>
    %c0_5 = arith.constant 0 : index
    %c0_6 = arith.constant 0 : index
    %5 = vector.load %arg3[%c0_5, %c0_6] : memref<32x4xf32, #tpu.memory_space<vmem>>, vector<32x4xf32>
    %6 = tpu.iota {dimensions = array<i32: 1>} : vector<32x4xi32>
    %c0_i32 = arith.constant 0 : i32
    %7 = vector.broadcast %c0_i32 : i32 to vector<32x4xi32>
    %8 = arith.cmpi eq, %6, %7 : vector<32x4xi32>
    %cst_7 = arith.constant 0.000000e+00 : f32
    %9 = vector.broadcast %cst_7 : f32 to vector<32x4xf32>
    %10 = arith.select %8, %5, %9 : vector<32x4xi1>, vector<32x4xf32>
    %cst_8 = arith.constant dense<0.000000e+00> : vector<32xf32>
    %11 = vector.multi_reduction <add>, %10, %cst_8 [1] : vector<32x4xf32> to vector<32xf32>
    %12 = vector.shape_cast %11 : vector<32xf32> to vector<32x1xf32>
    %13 = tpu.iota {dimensions = array<i32: 1>} : vector<32x4xi32>
    %c1_i32 = arith.constant 1 : i32
    %14 = vector.broadcast %c1_i32 : i32 to vector<32x4xi32>
    %15 = arith.cmpi eq, %13, %14 : vector<32x4xi32>
    %cst_9 = arith.constant 0.000000e+00 : f32
    %16 = vector.broadcast %cst_9 : f32 to vector<32x4xf32>
    %17 = arith.select %15, %5, %16 : vector<32x4xi1>, vector<32x4xf32>
    %cst_10 = arith.constant dense<0.000000e+00> : vector<32xf32>
    %18 = vector.multi_reduction <add>, %17, %cst_10 [1] : vector<32x4xf32> to vector<32xf32>
    %19 = vector.shape_cast %18 : vector<32xf32> to vector<32x1xf32>
    %cst_11 = arith.constant dense<0.000000e+00> : vector<32xf32>
    %20 = vector.multi_reduction <add>, %4, %cst_11 [1] : vector<32x2xf32> to vector<32xf32>
    %21 = vector.shape_cast %20 : vector<32xf32> to vector<32x1xf32>
    %cst_12 = arith.constant 2.000000e+00 : f32
    %22 = vector.broadcast %cst_12 : f32 to vector<32x1xf32>
    %23 = arith.divf %21, %22 : vector<32x1xf32>
    %24 = vector.broadcast %23 : vector<32x1xf32> to vector<32x2xf32>
    %25 = arith.subf %4, %24 : vector<32x2xf32>
    %26 = arith.mulf %25, %25 : vector<32x2xf32>
    %cst_13 = arith.constant dense<0.000000e+00> : vector<32xf32>
    %27 = vector.multi_reduction <add>, %26, %cst_13 [1] : vector<32x2xf32> to vector<32xf32>
    %28 = vector.shape_cast %27 : vector<32xf32> to vector<32x1xf32>
    %cst_14 = arith.constant 2.000000e+00 : f32
    %29 = vector.broadcast %cst_14 : f32 to vector<32x1xf32>
    %30 = arith.divf %28, %29 : vector<32x1xf32>
    %31 = vector.broadcast %23 : vector<32x1xf32> to vector<32x2xf32>
    %32 = arith.subf %4, %31 : vector<32x2xf32>
    %cst_15 = arith.constant 9.99999974E-6 : f32
    %33 = vector.broadcast %cst_15 : f32 to vector<32x1xf32>
    %34 = arith.addf %30, %33 : vector<32x1xf32>
    %35 = math.rsqrt %34 : vector<32x1xf32>
    %36 = vector.broadcast %35 : vector<32x1xf32> to vector<32x2xf32>
    %37 = arith.mulf %32, %36 : vector<32x2xf32>
    %38 = vector.broadcast %12 : vector<32x1xf32> to vector<32x2xf32>
    %39 = arith.mulf %37, %38 : vector<32x2xf32>
    %40 = vector.broadcast %19 : vector<32x1xf32> to vector<32x2xf32>
    %41 = arith.addf %39, %40 : vector<32x2xf32>
    %cst_16 = arith.constant 0.000000e+00 : f32
    %42 = vector.broadcast %cst_16 : f32 to vector<32x2xf32>
    %43 = arith.maximumf %41, %42 : vector<32x2xf32>
    %cst_17 = arith.constant dense<0.000000e+00> : vector<32x2xf32>
    %44 = tpu.matmul %1, %43, %cst_17 {dimension_numbers = #tpu.dot_dimension_numbers<[1], [0], [0], [1], [0, 0, 1, 1], [], []>} : vector<32x32xf32>, vector<32x2xf32>, vector<32x2xf32> -> vector<32x2xf32>
    %45 = vector.extract_strided_slice %44 {offsets = [0, 0], sizes = [16, 2], strides = [1, 1]} : vector<32x2xf32> to vector<16x2xf32>
    %46 = vector.extract_strided_slice %44 {offsets = [16, 0], sizes = [16, 2], strides = [1, 1]} : vector<32x2xf32> to vector<16x2xf32>
    %47 = vector.extract_strided_slice %5 {offsets = [0, 0], sizes = [16, 4], strides = [1, 1]} : vector<32x4xf32> to vector<16x4xf32>
    %48 = tpu.iota {dimensions = array<i32: 1>} : vector<16x4xi32>
    %c2_i32 = arith.constant 2 : i32
    %49 = vector.broadcast %c2_i32 : i32 to vector<16x4xi32>
    %50 = arith.cmpi eq, %48, %49 : vector<16x4xi32>
    %cst_18 = arith.constant 0.000000e+00 : f32
    %51 = vector.broadcast %cst_18 : f32 to vector<16x4xf32>
    %52 = arith.select %50, %47, %51 : vector<16x4xi1>, vector<16x4xf32>
    %cst_19 = arith.constant dense<0.000000e+00> : vector<16xf32>
    %53 = vector.multi_reduction <add>, %52, %cst_19 [1] : vector<16x4xf32> to vector<16xf32>
    %54 = vector.shape_cast %53 : vector<16xf32> to vector<16x1xf32>
    %55 = tpu.iota {dimensions = array<i32: 1>} : vector<16x4xi32>
    %c3_i32 = arith.constant 3 : i32
    %56 = vector.broadcast %c3_i32 : i32 to vector<16x4xi32>
    %57 = arith.cmpi eq, %55, %56 : vector<16x4xi32>
    %cst_20 = arith.constant 0.000000e+00 : f32
    %58 = vector.broadcast %cst_20 : f32 to vector<16x4xf32>
    %59 = arith.select %57, %47, %58 : vector<16x4xi1>, vector<16x4xf32>
    %cst_21 = arith.constant dense<0.000000e+00> : vector<16xf32>
    %60 = vector.multi_reduction <add>, %59, %cst_21 [1] : vector<16x4xf32> to vector<16xf32>
    %61 = vector.shape_cast %60 : vector<16xf32> to vector<16x1xf32>
    %cst_22 = arith.constant dense<0.000000e+00> : vector<16xf32>
    %62 = vector.multi_reduction <add>, %45, %cst_22 [1] : vector<16x2xf32> to vector<16xf32>
    %63 = vector.shape_cast %62 : vector<16xf32> to vector<16x1xf32>
    %cst_23 = arith.constant dense<0.000000e+00> : vector<16xf32>
    %64 = vector.multi_reduction <add>, %46, %cst_23 [1] : vector<16x2xf32> to vector<16xf32>
    %65 = vector.shape_cast %64 : vector<16xf32> to vector<16x1xf32>
    %66 = arith.addf %63, %65 : vector<16x1xf32>
    %cst_24 = arith.constant 5.000000e+00 : f32
    %67 = vector.broadcast %cst_24 : f32 to vector<16x1xf32>
    %68 = arith.divf %66, %67 : vector<16x1xf32>
    %69 = vector.broadcast %68 : vector<16x1xf32> to vector<16x2xf32>
    %70 = arith.subf %45, %69 : vector<16x2xf32>
    %71 = arith.mulf %70, %70 : vector<16x2xf32>
    %cst_25 = arith.constant dense<0.000000e+00> : vector<16xf32>
    %72 = vector.multi_reduction <add>, %71, %cst_25 [1] : vector<16x2xf32> to vector<16xf32>
    %73 = vector.shape_cast %72 : vector<16xf32> to vector<16x1xf32>
    %74 = vector.broadcast %68 : vector<16x1xf32> to vector<16x2xf32>
    %75 = arith.subf %46, %74 : vector<16x2xf32>
    %76 = arith.mulf %75, %75 : vector<16x2xf32>
    %cst_26 = arith.constant dense<0.000000e+00> : vector<16xf32>
    %77 = vector.multi_reduction <add>, %76, %cst_26 [1] : vector<16x2xf32> to vector<16xf32>
    %78 = vector.shape_cast %77 : vector<16xf32> to vector<16x1xf32>
    %79 = arith.addf %73, %78 : vector<16x1xf32>
    %80 = arith.mulf %68, %68 : vector<16x1xf32>
    %81 = arith.addf %79, %80 : vector<16x1xf32>
    %cst_27 = arith.constant 5.000000e+00 : f32
    %82 = vector.broadcast %cst_27 : f32 to vector<16x1xf32>
    %83 = arith.divf %81, %82 : vector<16x1xf32>
    %cst_28 = arith.constant 9.99999974E-6 : f32
    %84 = vector.broadcast %cst_28 : f32 to vector<16x1xf32>
    %85 = arith.addf %83, %84 : vector<16x1xf32>
    %86 = math.rsqrt %85 : vector<16x1xf32>
    %87 = arith.mulf %86, %54 : vector<16x1xf32>
    %88 = vector.broadcast %68 : vector<16x1xf32> to vector<16x2xf32>
    %89 = arith.subf %45, %88 : vector<16x2xf32>
    %90 = vector.broadcast %87 : vector<16x1xf32> to vector<16x2xf32>
    %91 = arith.mulf %89, %90 : vector<16x2xf32>
    %92 = vector.broadcast %61 : vector<16x1xf32> to vector<16x2xf32>
    %93 = arith.addf %91, %92 : vector<16x2xf32>
    %94 = vector.broadcast %68 : vector<16x1xf32> to vector<16x2xf32>
    %95 = arith.subf %46, %94 : vector<16x2xf32>
    %96 = vector.broadcast %87 : vector<16x1xf32> to vector<16x2xf32>
    %97 = arith.mulf %95, %96 : vector<16x2xf32>
    %98 = vector.broadcast %61 : vector<16x1xf32> to vector<16x2xf32>
    %99 = arith.addf %97, %98 : vector<16x2xf32>
    %cst_29 = arith.constant 0.000000e+00 : f32
    %100 = vector.broadcast %cst_29 : f32 to vector<16x1xf32>
    %101 = arith.subf %100, %68 : vector<16x1xf32>
    %102 = arith.mulf %101, %87 : vector<16x1xf32>
    %103 = arith.addf %102, %61 : vector<16x1xf32>
    %104 = tpu.iota {dimensions = array<i32: 1>} : vector<16x5xi32>
    %c4_i32 = arith.constant 4 : i32
    %105 = vector.broadcast %c4_i32 : i32 to vector<16x5xi32>
    %106 = arith.cmpi eq, %104, %105 : vector<16x5xi32>
    %cst_30 = arith.constant 0.000000e+00 : f32
    %107 = vector.shape_cast %103 : vector<16x1xf32> to vector<16x1xf32>
    %108 = vector.broadcast %107 : vector<16x1xf32> to vector<16x5xf32>
    %109 = vector.broadcast %cst_30 : f32 to vector<16x5xf32>
    %110 = arith.select %106, %108, %109 : vector<16x5xi1>, vector<16x5xf32>
    %c0_i32_31 = arith.constant 0 : i32
    %111 = vector.broadcast %c0_i32_31 : i32 to vector<16x5xi32>
    %112 = arith.cmpi eq, %104, %111 : vector<16x5xi32>
    %113 = tpu.iota {dimensions = array<i32: 1>} : vector<16x2xi32>
    %c0_i32_32 = arith.constant 0 : i32
    %114 = vector.broadcast %c0_i32_32 : i32 to vector<16x2xi32>
    %115 = arith.cmpi eq, %113, %114 : vector<16x2xi32>
    %cst_33 = arith.constant 0.000000e+00 : f32
    %116 = vector.broadcast %cst_33 : f32 to vector<16x2xf32>
    %117 = arith.select %115, %93, %116 : vector<16x2xi1>, vector<16x2xf32>
    %cst_34 = arith.constant dense<0.000000e+00> : vector<16xf32>
    %118 = vector.multi_reduction <add>, %117, %cst_34 [1] : vector<16x2xf32> to vector<16xf32>
    %119 = vector.shape_cast %118 : vector<16xf32> to vector<16x1xf32>
    %120 = vector.shape_cast %119 : vector<16x1xf32> to vector<16x1xf32>
    %121 = vector.broadcast %120 : vector<16x1xf32> to vector<16x5xf32>
    %122 = arith.select %112, %121, %110 : vector<16x5xi1>, vector<16x5xf32>
    %c1_i32_35 = arith.constant 1 : i32
    %123 = vector.broadcast %c1_i32_35 : i32 to vector<16x5xi32>
    %124 = arith.cmpi eq, %104, %123 : vector<16x5xi32>
    %125 = tpu.iota {dimensions = array<i32: 1>} : vector<16x2xi32>
    %c0_i32_36 = arith.constant 0 : i32
    %126 = vector.broadcast %c0_i32_36 : i32 to vector<16x2xi32>
    %127 = arith.cmpi eq, %125, %126 : vector<16x2xi32>
    %cst_37 = arith.constant 0.000000e+00 : f32
    %128 = vector.broadcast %cst_37 : f32 to vector<16x2xf32>
    %129 = arith.select %127, %99, %128 : vector<16x2xi1>, vector<16x2xf32>
    %cst_38 = arith.constant dense<0.000000e+00> : vector<16xf32>
    %130 = vector.multi_reduction <add>, %129, %cst_38 [1] : vector<16x2xf32> to vector<16xf32>
    %131 = vector.shape_cast %130 : vector<16xf32> to vector<16x1xf32>
    %132 = vector.shape_cast %131 : vector<16x1xf32> to vector<16x1xf32>
    %133 = vector.broadcast %132 : vector<16x1xf32> to vector<16x5xf32>
    %134 = arith.select %124, %133, %122 : vector<16x5xi1>, vector<16x5xf32>
    %c2_i32_39 = arith.constant 2 : i32
    %135 = vector.broadcast %c2_i32_39 : i32 to vector<16x5xi32>
    %136 = arith.cmpi eq, %104, %135 : vector<16x5xi32>
    %137 = tpu.iota {dimensions = array<i32: 1>} : vector<16x2xi32>
    %c1_i32_40 = arith.constant 1 : i32
    %138 = vector.broadcast %c1_i32_40 : i32 to vector<16x2xi32>
    %139 = arith.cmpi eq, %137, %138 : vector<16x2xi32>
    %cst_41 = arith.constant 0.000000e+00 : f32
    %140 = vector.broadcast %cst_41 : f32 to vector<16x2xf32>
    %141 = arith.select %139, %93, %140 : vector<16x2xi1>, vector<16x2xf32>
    %cst_42 = arith.constant dense<0.000000e+00> : vector<16xf32>
    %142 = vector.multi_reduction <add>, %141, %cst_42 [1] : vector<16x2xf32> to vector<16xf32>
    %143 = vector.shape_cast %142 : vector<16xf32> to vector<16x1xf32>
    %144 = vector.shape_cast %143 : vector<16x1xf32> to vector<16x1xf32>
    %145 = vector.broadcast %144 : vector<16x1xf32> to vector<16x5xf32>
    %146 = arith.select %136, %145, %134 : vector<16x5xi1>, vector<16x5xf32>
    %c3_i32_43 = arith.constant 3 : i32
    %147 = vector.broadcast %c3_i32_43 : i32 to vector<16x5xi32>
    %148 = arith.cmpi eq, %104, %147 : vector<16x5xi32>
    %149 = tpu.iota {dimensions = array<i32: 1>} : vector<16x2xi32>
    %c1_i32_44 = arith.constant 1 : i32
    %150 = vector.broadcast %c1_i32_44 : i32 to vector<16x2xi32>
    %151 = arith.cmpi eq, %149, %150 : vector<16x2xi32>
    %cst_45 = arith.constant 0.000000e+00 : f32
    %152 = vector.broadcast %cst_45 : f32 to vector<16x2xf32>
    %153 = arith.select %151, %99, %152 : vector<16x2xi1>, vector<16x2xf32>
    %cst_46 = arith.constant dense<0.000000e+00> : vector<16xf32>
    %154 = vector.multi_reduction <add>, %153, %cst_46 [1] : vector<16x2xf32> to vector<16xf32>
    %155 = vector.shape_cast %154 : vector<16xf32> to vector<16x1xf32>
    %156 = vector.shape_cast %155 : vector<16x1xf32> to vector<16x1xf32>
    %157 = vector.broadcast %156 : vector<16x1xf32> to vector<16x5xf32>
    %158 = arith.select %148, %157, %146 : vector<16x5xi1>, vector<16x5xf32>
    %c0_47 = arith.constant 0 : index
    %c0_48 = arith.constant 0 : index
    %c0_49 = arith.constant 0 : index
    %159 = vector.load %arg4[%c0_47, %c0_48, %c0_49] : memref<1x16x5xf32, #tpu.memory_space<vmem>>, vector<1x16x5xf32>
    %160 = vector.shape_cast %159 : vector<1x16x5xf32> to vector<16x5xf32>
    %161 = arith.addf %158, %160 : vector<16x5xf32>
    %cst_50 = arith.constant 0.000000e+00 : f32
    %162 = vector.broadcast %cst_50 : f32 to vector<16x5xf32>
    %163 = arith.maximumf %161, %162 : vector<16x5xf32>
    %c0_51 = arith.constant 0 : index
    %c0_52 = arith.constant 0 : index
    %c0_53 = arith.constant 0 : index
    %164 = vector.load %arg5[%c0_51, %c0_52, %c0_53] : memref<1x16x5xf32, #tpu.memory_space<vmem>>, vector<1x16x5xf32>
    %165 = vector.shape_cast %164 : vector<1x16x5xf32> to vector<16x5xf32>
    %166 = vector.shape_cast %163 : vector<16x5xf32> to vector<1x16x5xf32>
    tpu.vector_store %arg5[%c0_51, %c0_52, %c0_53], %166 {strides = array<i32>} : memref<1x16x5xf32, #tpu.memory_space<vmem>>, vector<1x16x5xf32>,
    return
  }
  func.func @transform_0(%arg0: i32) -> (i32, i32, i32) {
    %c0_i32 = arith.constant 0 : i32
    %c0_i32_0 = arith.constant 0 : i32
    %c0_i32_1 = arith.constant 0 : i32
    return %arg0, %c0_i32, %c0_i32_0 : i32, i32, i32
  }
  func.func @transform_1(%arg0: i32) -> (i32, i32) {
    %c0_i32 = arith.constant 0 : i32
    %c0_i32_0 = arith.constant 0 : i32
    %c0_i32_1 = arith.constant 0 : i32
    return %c0_i32, %c0_i32_0 : i32, i32
  }
  func.func @transform_2(%arg0: i32) -> (i32, i32) {
    %c0_i32 = arith.constant 0 : i32
    %c0_i32_0 = arith.constant 0 : i32
    %c0_i32_1 = arith.constant 0 : i32
    return %c0_i32, %c0_i32_0 : i32, i32
  }
  func.func @transform_3(%arg0: i32) -> (i32, i32, i32) {
    %c0_i32 = arith.constant 0 : i32
    %c0_i32_0 = arith.constant 0 : i32
    %c0_i32_1 = arith.constant 0 : i32
    return %arg0, %c0_i32, %c0_i32_0 : i32, i32, i32
  }
  func.func @transform_4(%arg0: i32) -> (i32, i32, i32) {
    %c0_i32 = arith.constant 0 : i32
    %c0_i32_0 = arith.constant 0 : i32
    %c0_i32_1 = arith.constant 0 : i32
    return %arg0, %c0_i32, %c0_i32_0 : i32, i32, i32
  }
}

</mosaic_0001>

<llo_original>
// kernel: tpu_custom_call.1
$region0: #{tpu_custom_call.1}
  #allocation0 [shape = 'u32[]', space=smem, size = 0x4, offset = 0x4, fixed_abs, tag = 'smem constant byte address 0x4 - core index']
  #allocation1 [shape = 'u32[72,128]{1,0:T(1,128)}', space=vmem, size = 0x9000, scoped, tag = 'internal scratch']
  %s0 = inlined_call_operand.vmem [shape: f32[2,32,2], index: 0, kind: input, shape index: {}]
  %s1 = inlined_call_operand.vmem [shape: f32[64,32], index: 1, kind: input, shape index: {}]
  %s2 = inlined_call_operand.vmem [shape: f32[32,4], index: 2, kind: input, shape index: {}]
  %s3 = inlined_call_operand.vmem [shape: f32[2,16,5], index: 3, kind: input, shape index: {}]
  %s4 = inlined_call_operand.vmem [shape: f32[2,16,5], index: 4, kind: output, shape index: {}]
  %s5 = sld [smem:[#allocation0]]
  $region49: #{tpu_custom_call.1} parent=0
    _
  %s7 = ssub.s32 1, %s5
  %s8 = scalar_select 0, %s7, %s5
  loop: start=0, step=1, limit=4
  $region2: #{tpu_custom_call.1} parent=0 // loop_pre_header
    _
  $region3: #{tpu_custom_call.1} parent=0 // loop_header
    %s10 = sphi 0, %s14
    %p11 = scmp.ge.s32.totalorder %s10, 4
    %s20 = sphi 0, %s22
    %s23 = sphi 0, %s20
    %s24 = sphi 0, %s23
    %s40 = sphi 0, %s24
    %s44 = sphi 0, %s44
    %s46 = sphi 0, %s44
    %s47 = sphi 0, %s46
    %s61 = sphi 0, %s47
    %s65 = sphi 0, %s65
    %s67 = sphi 0, %s65
    %s68 = sphi 0, %s67
    %s82 = sphi 0, %s68
    %s88 = sphi 0, %s90
    %s91 = sphi 0, %s88
    %s92 = sphi 0, %s91
    %s108 = sphi 0, %s92
    %s114 = sphi 0, %s116
    %s117 = sphi 0, %s114
    %s118 = sphi 0, %s117
    %s134 = sphi 0, %s118
  $region4: #{tpu_custom_call.1} parent=0 // loop_header_branch
    %13 = sbr.rel (%p11) target = $region8
  $region5: #{tpu_custom_call.1} parent=0 // loop_body
    %s15 = ssub.s32 %s10, 1
    %s16 = ssub.s32 %s10, 2
    %s17 = sadd.s32 %s10, 1
    %s18 = ssub.s32 %s10, %s17
    %p19 = scmp.eq.s32.totalorder %s18, 0
    %s21 = sadd.s32 %s20, 1
    %s22 = scalar_select %p19, %s20, %s21
    %p25 = pneg %p19
    %p26 = scmp.eq.s32.totalorder %s10, 1
    %p27 = por %p25, %p26
    %p28 = scmp.ne.s32.totalorder %s20, %s23
    %p29 = scmp.eq.s32.totalorder %s10, 0
    %p30 = por %p28, %p29
    %p31 = scmp.ne.s32.totalorder %s20, %s23
    %p32 = scmp.eq.s32.totalorder %s15, 1
    %p33 = por %p31, %p32
    %p34 = scmp.ne.s32.totalorder %s23, %s24
    %p35 = scmp.eq.s32.totalorder %s15, 0
    %p36 = por %p34, %p35
    %p37 = scmp.ne.s32.totalorder %s23, %s24
    %p38 = scmp.eq.s32.totalorder %s16, 1
    %p39 = por %p37, %p38
    %p41 = scmp.ne.s32.totalorder %s24, %s40
    %p42 = scmp.eq.s32.totalorder %s16, 0
    %p43 = por %p41, %p42
    %s45 = sadd.s32 %s44, 1
    %p48 = scmp.eq.s32.totalorder %s10, 1
    %p49 = scmp.ne.s32.totalorder %s44, %s46
    %p50 = scmp.eq.s32.totalorder %s10, 0
    %p51 = por %p49, %p50
    %p52 = scmp.ne.s32.totalorder %s44, %s46
    %p53 = scmp.eq.s32.totalorder %s15, 1
    %p54 = por %p52, %p53
    %p55 = scmp.ne.s32.totalorder %s46, %s47
    %p56 = scmp.eq.s32.totalorder %s15, 0
    %p57 = por %p55, %p56
    %p58 = scmp.ne.s32.totalorder %s46, %s47
    %p59 = scmp.eq.s32.totalorder %s16, 1
    %p60 = por %p58, %p59
    %p62 = scmp.ne.s32.totalorder %s47, %s61
    %p63 = scmp.eq.s32.totalorder %s16, 0
    %p64 = por %p62, %p63
    %s66 = sadd.s32 %s65, 1
    %p69 = scmp.eq.s32.totalorder %s10, 1
    %p70 = scmp.ne.s32.totalorder %s65, %s67
    %p71 = scmp.eq.s32.totalorder %s10, 0
    %p72 = por %p70, %p71
    %p73 = scmp.ne.s32.totalorder %s65, %s67
    %p74 = scmp.eq.s32.totalorder %s15, 1
    %p75 = por %p73, %p74
    %p76 = scmp.ne.s32.totalorder %s67, %s68
    %p77 = scmp.eq.s32.totalorder %s15, 0
    %p78 = por %p76, %p77
    %p79 = scmp.ne.s32.totalorder %s67, %s68
    %p80 = scmp.eq.s32.totalorder %s16, 1
    %p81 = por %p79, %p80
    %p83 = scmp.ne.s32.totalorder %s68, %s82
    %p84 = scmp.eq.s32.totalorder %s16, 0
    %p85 = por %p83, %p84
    %s86 = ssub.s32 %s10, %s17
    %p87 = scmp.eq.s32.totalorder %s86, 0
    %s89 = sadd.s32 %s88, 1
    %s90 = scalar_select %p87, %s88, %s89
    %p93 = pneg %p87
    %p94 = scmp.eq.s32.totalorder %s10, 1
    %p95 = por %p93, %p94
    %p96 = scmp.ne.s32.totalorder %s88, %s91
    %p97 = scmp.eq.s32.totalorder %s10, 0
    %p98 = por %p96, %p97
    %p99 = scmp.ne.s32.totalorder %s88, %s91
    %p100 = scmp.eq.s32.totalorder %s15, 1
    %p101 = por %p99, %p100
    %p102 = scmp.ne.s32.totalorder %s91, %s92
    %p103 = scmp.eq.s32.totalorder %s15, 0
    %p104 = por %p102, %p103
    %p105 = scmp.ne.s32.totalorder %s91, %s92
    %p106 = scmp.eq.s32.totalorder %s16, 1
    %p107 = por %p105, %p106
    %p109 = scmp.ne.s32.totalorder %s92, %s108
    %p110 = scmp.eq.s32.totalorder %s16, 0
    %p111 = por %p109, %p110
    %s112 = ssub.s32 %s10, %s17
    %p113 = scmp.eq.s32.totalorder %s112, 0
    %s115 = sadd.s32 %s114, 1
    %s116 = scalar_select %p113, %s114, %s115
    %p119 = pneg %p113
    %p120 = scmp.eq.s32.totalorder %s10, 1
    %p121 = por %p119, %p120
    %p122 = scmp.ne.s32.totalorder %s114, %s117
    %p123 = scmp.eq.s32.totalorder %s10, 0
    %p124 = por %p122, %p123
    %p125 = scmp.ne.s32.totalorder %s114, %s117
    %p126 = scmp.eq.s32.totalorder %s15, 1
    %p127 = por %p125, %p126
    %p128 = scmp.ne.s32.totalorder %s117, %s118
    %p129 = scmp.eq.s32.totalorder %s15, 0
    %p130 = por %p128, %p129
    %p131 = scmp.ne.s32.totalorder %s117, %s118
    %p132 = scmp.eq.s32.totalorder %s16, 1
    %p133 = por %p131, %p132
    %p135 = scmp.ne.s32.totalorder %s118, %s134
    %p136 = scmp.eq.s32.totalorder %s16, 0
    %p137 = por %p135, %p136
    %p138 = scmp.le.s32.totalorder 1, %s10
    %p139 = scmp.lt.s32.totalorder %s10, 3
    %p140 = pnand %p138, %p139
    %p141 = pneg %p140
    // Predicated region
    $region9: #{tpu_custom_call.1} parent=5 // pred_check
      _
    $region10: #{tpu_custom_call.1} parent=5 // pred_check_branch
      %143 = sbr.rel (%p140) target = $region12
    $region11: #{tpu_custom_call.1} parent=5 // pred_region
      %s144 = ssub.s32 %s10, 1
      // Predicated region
      $region13: #{tpu_custom_call.1} parent=11 // pred_check
        %p145 = pneg %p57
      $region14: #{tpu_custom_call.1} parent=11 // pred_check_branch
        %147 = sbr.rel (%p145) target = $region16
      $region15: #{tpu_custom_call.1} parent=11 // pred_region
        _
      $region16: #{tpu_custom_call.1} parent=11 // pred_fallthru
        _
      // Predicated region
      $region17: #{tpu_custom_call.1} parent=11 // pred_check
        %p148 = pneg %p78
      $region18: #{tpu_custom_call.1} parent=11 // pred_check_branch
        %150 = sbr.rel (%p148) target = $region20
      $region19: #{tpu_custom_call.1} parent=11 // pred_region
        _
      $region20: #{tpu_custom_call.1} parent=11 // pred_fallthru
        _
    $region12: #{tpu_custom_call.1} parent=5 // pred_fallthru
      _
    %p151 = scmp.lt.s32.totalorder %s10, 2
    // Predicated region
    $region21: #{tpu_custom_call.1} parent=5 // pred_check
      %p152 = pneg %p151
    $region22: #{tpu_custom_call.1} parent=5 // pred_check_branch
      %154 = sbr.rel (%p152) target = $region24
    $region23: #{tpu_custom_call.1} parent=5 // pred_region
      // Predicated region
      $region25: #{tpu_custom_call.1} parent=23 // pred_check
        %p155 = pneg %p30
      $region26: #{tpu_custom_call.1} parent=23 // pred_check_branch
        %157 = sbr.rel (%p155) target = $region28
      $region27: #{tpu_custom_call.1} parent=23 // pred_region
        %p158 = scmp.lt.s32.totalorder %s10, 1
        %s159 = scalar_select %p158, %s10, 1
        %s160 = smul.addr %s159, 4
        %s161 = smul.addr %s160, 8
        %s162 = scalar_lea.vmem %s0, %s161
      $region28: #{tpu_custom_call.1} parent=23 // pred_fallthru
        _
      // Predicated region
      $region29: #{tpu_custom_call.1} parent=23 // pred_check
        %p163 = pneg %p98
      $region30: #{tpu_custom_call.1} parent=23 // pred_check_branch
        %165 = sbr.rel (%p163) target = $region32
      $region31: #{tpu_custom_call.1} parent=23 // pred_region
        %p166 = scmp.lt.s32.totalorder %s10, 1
        %s167 = scalar_select %p166, %s10, 1
        %s168 = smul.addr %s167, 2
        %s169 = smul.addr %s168, 8
        %s170 = scalar_lea.vmem %s3, %s169
      $region32: #{tpu_custom_call.1} parent=23 // pred_fallthru
        _
    $region24: #{tpu_custom_call.1} parent=5 // pred_fallthru
      _
    %p171 = scmp.le.s32.totalorder 1, %s10
    %p172 = scmp.lt.s32.totalorder %s10, 3
    %p173 = pnand %p171, %p172
    %p174 = pneg %p173
    // Predicated region
    $region33: #{tpu_custom_call.1} parent=5 // pred_check
      _
    $region34: #{tpu_custom_call.1} parent=5 // pred_check_branch
      %176 = sbr.rel (%p173) target = $region36
    $region35: #{tpu_custom_call.1} parent=5 // pred_region
      %s177 = ssub.s32 %s10, 1
      %p178 = scmp.lt.s32.totalorder %s15, 1
      %s179 = scalar_select %p178, %s15, 1
      %s180 = smul.addr %s179, 4
      %s181 = smul.addr %s180, 8
      %s182 = scalar_lea.vmem %s0, %s181
      %p183 = pneg %p36
      %p184 = pneg %p33
      %p185 = pneg %p57
      %p186 = pneg %p54
      %p187 = pneg %p78
      %p188 = pneg %p75
      %p189 = scmp.lt.s32.totalorder %s15, 1
      %s190 = scalar_select %p189, %s15, 1
      %s191 = smul.addr %s190, 2
      %s192 = smul.addr %s191, 8
      %s193 = scalar_lea.vmem %s3, %s192
      %p194 = pneg %p104
      %p195 = pneg %p101
      %p196 = pneg %p130
      %p197 = pneg %p127
      %p198 = scmp.lt.s32.totalorder %s15, 1
      %s199 = scalar_select %p198, %s15, 1
      %s200 = smul.addr %s199, 2
      %s201 = smul.addr %s200, 8
      %s202 = scalar_lea.vmem %s4, %s201
      %p203 = scmp.lt.s32.totalorder %s15, 1
      %s204 = scalar_select %p203, %s15, 1
      %s205 = smul.addr %s204, 4
      %s206 = smul.addr %s205, 8
      %s207 = scalar_lea.vmem %s0, %s206
      %p208 = scmp.lt.s32.totalorder %s15, 1
      %s209 = scalar_select %p208, %s15, 1
      %s210 = smul.addr %s209, 2
      %s211 = smul.addr %s210, 8
      %s212 = scalar_lea.vmem %s3, %s211
      %p213 = scmp.lt.s32.totalorder %s15, 1
      %s214 = scalar_select %p213, %s15, 1
      %s215 = smul.addr %s214, 2
      %s216 = smul.addr %s215, 8
      %s217 = scalar_lea.vmem %s4, %s216
      %v218 = vld [vmem:[%s1] sm:$0xff]
      %v219 = vld [vmem:[%s1 + $0x8] sm:$0xff]
      %v220 = vld [vmem:[%s1 + $0x10] sm:$0xff]
      %v221 = vld [vmem:[%s1 + $0x18] sm:$0xff]
      %v222 = vld [vmem:[%s1 + $0x20] sm:$0xff]
      %v223 = vld [vmem:[%s1 + $0x28] sm:$0xff]
      %v224 = vld [vmem:[%s1 + $0x30] sm:$0xff]
      %v225 = vld [vmem:[%s1 + $0x38] sm:$0xff]
      %v226 = vld [vmem:[%s207] sm:$0xff]
      %v227 = vld [vmem:[%s207 + $0x8] sm:$0xff]
      %v228 = vld [vmem:[%s207 + $0x10] sm:$0xff]
      %v229 = vld [vmem:[%s207 + $0x18] sm:$0xff]
      %vm230 = vcmask 261120
      %v232 = vsel %vm230, %v218, 0
      %v235 = vsel %vm230, %v219, 0
      %v238 = vsel %vm230, %v220, 0
      %v241 = vsel %vm230, %v221, 0
      %243 = vmatpush.msra.mxu0 0.0
      %244 = vmatpush.msra.mxu0 0.0
      %245 = vmatpush.msra.mxu0 0.0
      %246 = vmatpush.msra.mxu0 0.0
      %247 = vmatpush.msra.mxu0 0.0
      %248 = vmatpush.msra.mxu0 0.0
      %249 = vmatpush.msra.mxu0 0.0
      %250 = vmatpush.msra.mxu0 0.0
      %251 = vmatpush.msra.mxu0 0.0
      %252 = vmatpush.msra.mxu0 0.0
      %253 = vmatpush.msra.mxu0 0.0
      %254 = vmatpush.msra.mxu0 0.0
      %255 = vmatpush.msra.mxu0 %v229
      %256 = vmatpush.msra.mxu0 %v228
      %257 = vmatpush.msra.mxu0 %v227
      %258 = vmatpush.msra.mxu0 %v226
      %259 = vmatmul.f32.gmra.mxu0 %v232
      %v260 = vpop.f32.mrf.mxu0
      %v261 = vadd.f32 0.0, %v260
      %262 = vmatmul.f32.gmra.mxu0 %v235
      %v263 = vpop.f32.mrf.mxu0
      %v264 = vadd.f32 0.0, %v263
      %265 = vmatmul.f32.gmra.mxu0 %v238
      %v266 = vpop.f32.mrf.mxu0
      %v267 = vadd.f32 0.0, %v266
      %268 = vmatmul.f32.gmra.mxu0 %v241
      %v269 = vpop.f32.mrf.mxu0
      %v270 = vadd.f32 0.0, %v269
      %271 = vdwg.mxu0
      %v272 = vld [vmem:[%s2] sm:$0xff]
      %v273 = vld [vmem:[%s2 + $0x8] sm:$0xff]
      %v274 = vld [vmem:[%s2 + $0x10] sm:$0xff]
      %v275 = vld [vmem:[%s2 + $0x18] sm:$0xff]
      %v276 = vlaneseq
      %v277 = vand.u32 %v276, 127
      %vm278 = vcmp.eq.s32.totalorder %v277, 0
      %v279 = vsel %vm278, %v272, 0.0
      %v280 = vsel %vm278, %v273, 0.0
      %v281 = vsel %vm278, %v274, 0.0
      %v282 = vsel %vm278, %v275, 0.0
      %vm283 = vcmask 31744
      %v284 = vsel %vm283, %v279, 0.0
      %285 = vadd.xlane.f32.xlu0 %v284
      %v286 = vpop.xlane.xlu0 %285
      %v287 = vsel %vm283, %v280, 0.0
      %288 = vadd.xlane.f32.xlu0 %v287
      %v289 = vpop.xlane.xlu0 %288
      %v290 = vsel %vm283, %v281, 0.0
      %291 = vadd.xlane.f32.xlu0 %v290
      %v292 = vpop.xlane.xlu0 %291
      %v293 = vsel %vm283, %v282, 0.0
      %294 = vadd.xlane.f32.xlu0 %v293
      %v295 = vpop.xlane.xlu0 %294
      %vm296 = vcmp.eq.s32.totalorder %v277, 1
      %v297 = vsel %vm296, %v272, 0.0
      %v298 = vsel %vm296, %v273, 0.0
      %v299 = vsel %vm296, %v274, 0.0
      %v300 = vsel %vm296, %v275, 0.0
      %v301 = vsel %vm283, %v297, 0.0
      %302 = vadd.xlane.f32.xlu0 %v301
      %v303 = vpop.xlane.xlu0 %302
      %v304 = vsel %vm283, %v298, 0.0
      %305 = vadd.xlane.f32.xlu0 %v304
      %v306 = vpop.xlane.xlu0 %305
      %v307 = vsel %vm283, %v299, 0.0
      %308 = vadd.xlane.f32.xlu0 %v307
      %v309 = vpop.xlane.xlu0 %308
      %v310 = vsel %vm283, %v300, 0.0
      %311 = vadd.xlane.f32.xlu0 %v310
      %v312 = vpop.xlane.xlu0 %311
      %vm313 = vcmask 15360
      %v314 = vsel %vm313, %v261, 0.0
      %315 = vadd.xlane.f32.xlu0 %v314
      %v316 = vpop.xlane.xlu0 %315
      %v317 = vsel %vm313, %v264, 0.0
      %318 = vadd.xlane.f32.xlu0 %v317
      %v319 = vpop.xlane.xlu0 %318
      %v320 = vsel %vm313, %v267, 0.0
      %321 = vadd.xlane.f32.xlu0 %v320
      %v322 = vpop.xlane.xlu0 %321
      %v323 = vsel %vm313, %v270, 0.0
      %324 = vadd.xlane.f32.xlu0 %v323
      %v325 = vpop.xlane.xlu0 %324
      %v326 = vrcp.pop 2.0
      %v327 = vmul.f32 2.0, %v326
      %v328 = vsub.f32 1.0, %v327
      %v329 = vmul.f32 %v326, %v328
      %v330 = vadd.f32 %v326, %v329
      %vm331 = vweird.f32 %v326
      %v332 = vsel %vm331, %v326, %v330
      %v333 = vmul.f32 %v316, %v332
      %v334 = vmul.f32 %v319, %v332
      %v335 = vmul.f32 %v322, %v332
      %v336 = vmul.f32 %v325, %v332
      %v337 = vsub.f32 %v261, %v333
      %v338 = vsub.f32 %v264, %v334
      %v339 = vsub.f32 %v267, %v335
      %v340 = vsub.f32 %v270, %v336
      %v341 = vmul.f32 %v337, %v337
      %v342 = vmul.f32 %v338, %v338
      %v343 = vmul.f32 %v339, %v339
      %v344 = vmul.f32 %v340, %v340
      %v345 = vsel %vm313, %v341, 0.0
      %346 = vadd.xlane.f32.xlu0 %v345
      %v347 = vpop.xlane.xlu0 %346
      %v348 = vsel %vm313, %v342, 0.0
      %349 = vadd.xlane.f32.xlu0 %v348
      %v350 = vpop.xlane.xlu0 %349
      %v351 = vsel %vm313, %v343, 0.0
      %352 = vadd.xlane.f32.xlu0 %v351
      %v353 = vpop.xlane.xlu0 %352
      %v354 = vsel %vm313, %v344, 0.0
      %355 = vadd.xlane.f32.xlu0 %v354
      %v356 = vpop.xlane.xlu0 %355
      %v357 = vmul.f32 %v347, %v332
      %v358 = vmul.f32 %v350, %v332
      %v359 = vmul.f32 %v353, %v332
      %v360 = vmul.f32 %v356, %v332
      %v361 = vadd.f32 %v357, 1e-05
      %v362 = vadd.f32 %v358, 1e-05
      %v363 = vadd.f32 %v359, 1e-05
      %v364 = vadd.f32 %v360, 1e-05
      %v365 = vrsqrt.pop %v361
      %v366 = vmul.f32 %v365, %v361
      %v367 = vmul.f32 %v366, %v365
      %v368 = vmul.f32 0.5, %v367
      %v369 = vsub.f32 1.5, %v368
      %v370 = vmul.f32 %v365, %v369
      %vm371 = vweird.f32 %v361
      %vm372 = vweird.f32 %v365
      %vm373 = vmor %vm371, %vm372
      %v374 = vsel %vm373, %v365, %v370
      %v375 = vrsqrt.pop %v362
      %v376 = vmul.f32 %v375, %v362
      %v377 = vmul.f32 %v376, %v375
      %v378 = vmul.f32 0.5, %v377
      %v379 = vsub.f32 1.5, %v378
      %v380 = vmul.f32 %v375, %v379
      %vm381 = vweird.f32 %v362
      %vm382 = vweird.f32 %v375
      %vm383 = vmor %vm381, %vm382
      %v384 = vsel %vm383, %v375, %v380
      %v385 = vrsqrt.pop %v363
      %v386 = vmul.f32 %v385, %v363
      %v387 = vmul.f32 %v386, %v385
      %v388 = vmul.f32 0.5, %v387
      %v389 = vsub.f32 1.5, %v388
      %v390 = vmul.f32 %v385, %v389
      %vm391 = vweird.f32 %v363
      %vm392 = vweird.f32 %v385
      %vm393 = vmor %vm391, %vm392
      %v394 = vsel %vm393, %v385, %v390
      %v395 = vrsqrt.pop %v364
      %v396 = vmul.f32 %v395, %v364
      %v397 = vmul.f32 %v396, %v395
      %v398 = vmul.f32 0.5, %v397
      %v399 = vsub.f32 1.5, %v398
      %v400 = vmul.f32 %v395, %v399
      %vm401 = vweird.f32 %v364
      %vm402 = vweird.f32 %v395
      %vm403 = vmor %vm401, %vm402
      %v404 = vsel %vm403, %v395, %v400
      %v405 = vmul.f32 %v337, %v374
      %v406 = vmul.f32 %v338, %v384
      %v407 = vmul.f32 %v339, %v394
      %v408 = vmul.f32 %v340, %v404
      %v409 = vmul.f32 %v405, %v286
      %v410 = vmul.f32 %v406, %v289
      %v411 = vmul.f32 %v407, %v292
      %v412 = vmul.f32 %v408, %v295
      %v413 = vadd.f32 %v409, %v303
      %v414 = vadd.f32 %v410, %v306
      %v415 = vadd.f32 %v411, %v309
      %v416 = vadd.f32 %v412, %v312
      %v417 = vmax.f32 %v413, 0.0
      %v418 = vmax.f32 %v414, 0.0
      %v419 = vmax.f32 %v415, 0.0
      %v420 = vmax.f32 %v416, 0.0
      %v422 = vsel %vm230, %v222, 0
      %v425 = vsel %vm230, %v223, 0
      %v428 = vsel %vm230, %v224, 0
      %v431 = vsel %vm230, %v225, 0
      %433 = vmatpush.msra.mxu0 0.0
      %434 = vmatpush.msra.mxu0 0.0
      %435 = vmatpush.msra.mxu0 0.0
      %436 = vmatpush.msra.mxu0 0.0
      %437 = vmatpush.msra.mxu0 0.0
      %438 = vmatpush.msra.mxu0 0.0
      %439 = vmatpush.msra.mxu0 0.0
      %440 = vmatpush.msra.mxu0 0.0
      %441 = vmatpush.msra.mxu0 0.0
      %442 = vmatpush.msra.mxu0 0.0
      %443 = vmatpush.msra.mxu0 0.0
      %444 = vmatpush.msra.mxu0 0.0
      %445 = vmatpush.msra.mxu0 %v420
      %446 = vmatpush.msra.mxu0 %v419
      %447 = vmatpush.msra.mxu0 %v418
      %448 = vmatpush.msra.mxu0 %v417
      %449 = vmatmul.f32.gmra.mxu0 %v422
      %v450 = vpop.f32.mrf.mxu0
      %v451 = vadd.f32 0.0, %v450
      %452 = vmatmul.f32.gmra.mxu0 %v425
      %v453 = vpop.f32.mrf.mxu0
      %v454 = vadd.f32 0.0, %v453
      %455 = vmatmul.f32.gmra.mxu0 %v428
      %v456 = vpop.f32.mrf.mxu0
      %v457 = vadd.f32 0.0, %v456
      %458 = vmatmul.f32.gmra.mxu0 %v431
      %v459 = vpop.f32.mrf.mxu0
      %v460 = vadd.f32 0.0, %v459
      %461 = vdwg.mxu0
      %vm462 = vcmp.eq.s32.totalorder %v277, 2
      %v463 = vsel %vm462, %v272, 0.0
      %v464 = vsel %vm462, %v273, 0.0
      %v465 = vsel %vm283, %v463, 0.0
      %466 = vadd.xlane.f32.xlu0 %v465
      %v467 = vpop.xlane.xlu0 %466
      %v468 = vsel %vm283, %v464, 0.0
      %469 = vadd.xlane.f32.xlu0 %v468
      %v470 = vpop.xlane.xlu0 %469
      %vm471 = vcmp.eq.s32.totalorder %v277, 3
      %v472 = vsel %vm471, %v272, 0.0
      %v473 = vsel %vm471, %v273, 0.0
      %v474 = vsel %vm283, %v472, 0.0
      %475 = vadd.xlane.f32.xlu0 %v474
      %v476 = vpop.xlane.xlu0 %475
      %v477 = vsel %vm283, %v473, 0.0
      %478 = vadd.xlane.f32.xlu0 %v477
      %v479 = vpop.xlane.xlu0 %478
      %v480 = vsel %vm313, %v451, 0.0
      %481 = vadd.xlane.f32.xlu0 %v480
      %v482 = vpop.xlane.xlu0 %481
      %v483 = vsel %vm313, %v454, 0.0
      %484 = vadd.xlane.f32.xlu0 %v483
      %v485 = vpop.xlane.xlu0 %484
      %v486 = vsel %vm313, %v457, 0.0
      %487 = vadd.xlane.f32.xlu0 %v486
      %v488 = vpop.xlane.xlu0 %487
      %v489 = vsel %vm313, %v460, 0.0
      %490 = vadd.xlane.f32.xlu0 %v489
      %v491 = vpop.xlane.xlu0 %490
      %v492 = vadd.f32 %v482, %v488
      %v493 = vadd.f32 %v485, %v491
      %v494 = vrcp.pop 5.0
      %v495 = vmul.f32 5.0, %v494
      %v496 = vsub.f32 1.0, %v495
      %v497 = vmul.f32 %v494, %v496
      %v498 = vadd.f32 %v494, %v497
      %vm499 = vweird.f32 %v494
      %v500 = vsel %vm499, %v494, %v498
      %v501 = vmul.f32 %v492, %v500
      %v502 = vmul.f32 %v493, %v500
      %v503 = vsub.f32 %v451, %v501
      %v504 = vsub.f32 %v454, %v502
      %v505 = vmul.f32 %v503, %v503
      %v506 = vmul.f32 %v504, %v504
      %v507 = vsel %vm313, %v505, 0.0
      %508 = vadd.xlane.f32.xlu0 %v507
      %v509 = vpop.xlane.xlu0 %508
      %v510 = vsel %vm313, %v506, 0.0
      %511 = vadd.xlane.f32.xlu0 %v510
      %v512 = vpop.xlane.xlu0 %511
      %v513 = vsub.f32 %v457, %v501
      %v514 = vsub.f32 %v460, %v502
      %v515 = vmul.f32 %v513, %v513
      %v516 = vmul.f32 %v514, %v514
      %v517 = vsel %vm313, %v515, 0.0
      %518 = vadd.xlane.f32.xlu0 %v517
      %v519 = vpop.xlane.xlu0 %518
      %v520 = vsel %vm313, %v516, 0.0
      %521 = vadd.xlane.f32.xlu0 %v520
      %v522 = vpop.xlane.xlu0 %521
      %v523 = vadd.f32 %v509, %v519
      %v524 = vadd.f32 %v512, %v522
      %v525 = vmul.f32 %v501, %v501
      %v526 = vmul.f32 %v502, %v502
      %v527 = vadd.f32 %v523, %v525
      %v528 = vadd.f32 %v524, %v526
      %v529 = vmul.f32 %v527, %v500
      %v530 = vmul.f32 %v528, %v500
      %v531 = vadd.f32 %v529, 1e-05
      %v532 = vadd.f32 %v530, 1e-05
      %v533 = vrsqrt.pop %v531
      %v534 = vmul.f32 %v533, %v531
      %v535 = vmul.f32 %v534, %v533
      %v536 = vmul.f32 0.5, %v535
      %v537 = vsub.f32 1.5, %v536
      %v538 = vmul.f32 %v533, %v537
      %vm539 = vweird.f32 %v531
      %vm540 = vweird.f32 %v533
      %vm541 = vmor %vm539, %vm540
      %v542 = vsel %vm541, %v533, %v538
      %v543 = vrsqrt.pop %v532
      %v544 = vmul.f32 %v543, %v532
      %v545 = vmul.f32 %v544, %v543
      %v546 = vmul.f32 0.5, %v545
      %v547 = vsub.f32 1.5, %v546
      %v548 = vmul.f32 %v543, %v547
      %vm549 = vweird.f32 %v532
      %vm550 = vweird.f32 %v543
      %vm551 = vmor %vm549, %vm550
      %v552 = vsel %vm551, %v543, %v548
      %v553 = vmul.f32 %v542, %v467
      %v554 = vmul.f32 %v552, %v470
      %v555 = vmul.f32 %v503, %v553
      %v556 = vmul.f32 %v504, %v554
      %v557 = vadd.f32 %v555, %v476
      %v558 = vadd.f32 %v556, %v479
      %v559 = vmul.f32 %v513, %v553
      %v560 = vmul.f32 %v514, %v554
      %v561 = vadd.f32 %v559, %v476
      %v562 = vadd.f32 %v560, %v479
      %v563 = vsub.f32 0.0, %v501
      %v564 = vsub.f32 0.0, %v502
      %v565 = vmul.f32 %v563, %v553
      %v566 = vmul.f32 %v564, %v554
      %v567 = vadd.f32 %v565, %v476
      %v568 = vadd.f32 %v566, %v479
      %vm569 = vcmp.eq.s32.totalorder %v277, 4
      %v570 = vsel %vm569, %v567, 0.0
      %v571 = vsel %vm569, %v568, 0.0
      %v572 = vsel %vm278, %v557, 0.0
      %v573 = vsel %vm278, %v558, 0.0
      %v574 = vsel %vm313, %v572, 0.0
      %575 = vadd.xlane.f32.xlu0 %v574
      %v576 = vpop.xlane.xlu0 %575
      %v577 = vsel %vm313, %v573, 0.0
      %578 = vadd.xlane.f32.xlu0 %v577
      %v579 = vpop.xlane.xlu0 %578
      %v580 = vsel %vm278, %v576, %v570
      %v581 = vsel %vm278, %v579, %v571
      %v582 = vsel %vm278, %v561, 0.0
      %v583 = vsel %vm278, %v562, 0.0
      %v584 = vsel %vm313, %v582, 0.0
      %585 = vadd.xlane.f32.xlu0 %v584
      %v586 = vpop.xlane.xlu0 %585
      %v587 = vsel %vm313, %v583, 0.0
      %588 = vadd.xlane.f32.xlu0 %v587
      %v589 = vpop.xlane.xlu0 %588
      %v590 = vsel %vm296, %v586, %v580
      %v591 = vsel %vm296, %v589, %v581
      %v592 = vsel %vm296, %v557, 0.0
      %v593 = vsel %vm296, %v558, 0.0
      %v594 = vsel %vm313, %v592, 0.0
      %595 = vadd.xlane.f32.xlu0 %v594
      %v596 = vpop.xlane.xlu0 %595
      %v597 = vsel %vm313, %v593, 0.0
      %598 = vadd.xlane.f32.xlu0 %v597
      %v599 = vpop.xlane.xlu0 %598
      %v600 = vsel %vm462, %v596, %v590
      %v601 = vsel %vm462, %v599, %v591
      %v602 = vsel %vm296, %v561, 0.0
      %v603 = vsel %vm296, %v562, 0.0
      %v604 = vsel %vm313, %v602, 0.0
      %605 = vadd.xlane.f32.xlu0 %v604
      %v606 = vpop.xlane.xlu0 %605
      %v607 = vsel %vm313, %v603, 0.0
      %608 = vadd.xlane.f32.xlu0 %v607
      %v609 = vpop.xlane.xlu0 %608
      %v610 = vsel %vm471, %v606, %v600
      %v611 = vsel %vm471, %v609, %v601
      %v612 = vld [vmem:[%s212] sm:$0xff]
      %v613 = vld [vmem:[%s212 + $0x8] sm:$0xff]
      %v614 = vadd.f32 %v610, %v612
      %v615 = vadd.f32 %v611, %v613
      %v616 = vmax.f32 %v614, 0.0
      %v617 = vmax.f32 %v615, 0.0
      %vm618 = vcmask 39936
      %619 = vst.msk [vmem:[%s217] sm:$0xff] %vm618, %v616
      %620 = vst.msk [vmem:[%s217 + $0x8] sm:$0xff] %vm618, %v617
      %p621 = scmp.lt.s32.totalorder %s15, 1
      %s622 = scalar_select %p621, %s15, 1
      %s623 = smul.addr %s622, 2
      %s624 = smul.addr %s623, 8
      %s625 = scalar_lea.vmem %s4, %s624
      // Predicated region
      $region37: #{tpu_custom_call.1} parent=35 // pred_check
        %p626 = pneg %p127
      $region38: #{tpu_custom_call.1} parent=35 // pred_check_branch
        %628 = sbr.rel (%p626) target = $region40
      $region39: #{tpu_custom_call.1} parent=35 // pred_region
        _
      $region40: #{tpu_custom_call.1} parent=35 // pred_fallthru
        _
    $region36: #{tpu_custom_call.1} parent=5 // pred_fallthru
      _
    %p629 = scmp.le.s32.totalorder 2, %s10
    // Predicated region
    $region41: #{tpu_custom_call.1} parent=5 // pred_check
      %p630 = pneg %p629
    $region42: #{tpu_custom_call.1} parent=5 // pred_check_branch
      %632 = sbr.rel (%p630) target = $region44
    $region43: #{tpu_custom_call.1} parent=5 // pred_region
      %s633 = ssub.s32 %s10, 2
      // Predicated region
      $region45: #{tpu_custom_call.1} parent=43 // pred_check
        %p634 = pneg %p133
      $region46: #{tpu_custom_call.1} parent=43 // pred_check_branch
        %636 = sbr.rel (%p634) target = $region48
      $region47: #{tpu_custom_call.1} parent=43 // pred_region
        %p637 = scmp.lt.s32.totalorder %s16, 1
        %s638 = scalar_select %p637, %s16, 1
        %s639 = smul.addr %s638, 2
        %s640 = smul.addr %s639, 8
        %s641 = scalar_lea.vmem %s4, %s640
      $region48: #{tpu_custom_call.1} parent=43 // pred_fallthru
        _
    $region44: #{tpu_custom_call.1} parent=5 // pred_fallthru
      _
  $region6: #{tpu_custom_call.1} parent=0 // loop_footer
    %s14 = sadd.s32 1, %s10
  $region7: #{tpu_custom_call.1} parent=0 // loop_footer_branch
    %9 = sbr.rel target = $region3
  $region8: #{tpu_custom_call.1} parent=0 // loop_exit
    _

</llo_original>
